<compile_context>
chip_gen: v6e
topology: v6e:2x2x1
jax: 0.10.0
libtpu: 0.0.40
codegen_flags: <defaults>
</compile_context>

<pallas_src>
import jax
import jax.numpy as jnp
from jax.experimental import pallas as pl
from jax.experimental.pallas import tpu as pltpu


def _bn_relu_pool_kernel(x_ref, scale_ref, shift_ref, out_ref):
    # x_ref:     [4, rt, C*Wh]  the four 2x2-pooling phases (row/col parity)
    # scale_ref: [1, C*Wh]      per-channel BN scale, repeated Wh times along lanes
    # shift_ref: [1, C*Wh]      per-channel BN shift, repeated Wh times along lanes
    # out_ref:   [rt, C*Wh]
    s = scale_ref[...]
    b = shift_ref[...]
    acc = jnp.maximum(x_ref[0] * s + b, 0.0)          # BN + ReLU per phase (VPU)
    acc = acc + jnp.maximum(x_ref[1] * s + b, 0.0)
    acc = acc + jnp.maximum(x_ref[2] * s + b, 0.0)
    acc = acc + jnp.maximum(x_ref[3] * s + b, 0.0)
    out_ref[...] = acc * 0.25                         # 2x2 average


def _pick_row_tile(rows, lane_width):
    # VMEM per block-row ~ (4 input rows + 1 output row) * 2 pipeline buffers * 4 B.
    bytes_per_row = (4 + 1) * 2 * lane_width * 4
    cap = max(8, (16 * 1024 * 1024) // bytes_per_row)
    for t in (512, 256, 128, 64, 32, 16, 8):
        if t <= cap and rows % t == 0:
            return t
    return rows  # tiny / ragged case: single full-extent block


def bn_blur_block(x, gamma, beta, running_mean, running_var, *, eps=1e-5):
    """BNBlurBlock forward: eval-mode BatchNorm2d -> ReLU -> AvgPool2d(2, 2).

    x: [B, C, H, W] (NCHW, like the PyTorch module); gamma/beta/running_mean/
    running_var: [C].  Returns [B, C, H//2, W//2] float32.
    """
    B, C, H, W = x.shape
    assert H % 2 == 0 and W % 2 == 0, "2x2/2 pooling needs even spatial dims"
    Hh, Wh = H // 2, W // 2
    CWh = C * Wh
    R = B * Hh

    x = jnp.asarray(x, jnp.float32)
    gamma = jnp.asarray(gamma, jnp.float32)
    beta = jnp.asarray(beta, jnp.float32)
    running_mean = jnp.asarray(running_mean, jnp.float32)
    running_var = jnp.asarray(running_var, jnp.float32)

    # Fold BN into per-channel scale/shift (eval mode), laid out along lanes to
    # match the (c, wh) lane ordering of the slabs below.
    scale = gamma / jnp.sqrt(running_var + eps)                      # [C]
    shift = beta - running_mean * scale                              # [C]
    scale_row = jnp.repeat(scale, Wh).reshape(1, CWh)                # [1, C*Wh]
    shift_row = jnp.repeat(shift, Wh).reshape(1, CWh)                # [1, C*Wh]

    # NCHW -> four pooling-phase slabs (wrapper-side layout plumbing only):
    #   x4[p*2+q, b*Hh+i, c*Wh+j] = x[b, c, 2i+p, 2j+q]
    x4 = (x.reshape(B, C, Hh, 2, Wh, 2)
           .transpose(3, 5, 0, 2, 1, 4)
           .reshape(4, R, CWh))

    rt = _pick_row_tile(R, CWh)
    grid = (pl.cdiv(R, rt),)

    out = pl.pallas_call(
        _bn_relu_pool_kernel,
        out_shape=jax.ShapeDtypeStruct((R, CWh), jnp.float32),
        grid_spec=pltpu.PrefetchScalarGridSpec(
            num_scalar_prefetch=0,
            grid=grid,
            in_specs=[
                pl.BlockSpec((4, rt, CWh), lambda i: (0, i, 0)),     # 4 phases
                pl.BlockSpec((1, CWh), lambda i: (0, 0)),            # BN scale
                pl.BlockSpec((1, CWh), lambda i: (0, 0)),            # BN shift
            ],
            out_specs=pl.BlockSpec((rt, CWh), lambda i: (i, 0)),
        ),
        compiler_params=pltpu.CompilerParams(
            dimension_semantics=("parallel",),
            vmem_limit_bytes=64 << 20),
    )(x4, scale_row, shift_row)

    # [R, C*Wh] -> [B, Hh, C, Wh] -> NCHW [B, C, Hh, Wh]
    return out.reshape(B, Hh, C, Wh).transpose(0, 2, 1, 3)


def _reference(x, gamma, beta, mean, var, eps=1e-5):
    """Plain-JAX reproduction of BatchNorm2d(eval) -> ReLU -> AvgPool2d(2, 2)."""
    xb = (x - mean[None, :, None, None]) / jnp.sqrt(var[None, :, None, None] + eps)
    xb = xb * gamma[None, :, None, None] + beta[None, :, None, None]
    xb = jnp.maximum(xb, 0.0)
    B, C, H, W = xb.shape
    return xb.reshape(B, C, H // 2, 2, W // 2, 2).mean(axis=(3, 5))


if __name__ == "__main__":
    # Small shapes consistent with the module: NCHW image batch.
    B, C, H, W = 2, 4, 16, 16

    key = jax.random.PRNGKey(0)
    kx, kg, kb, km, kv = jax.random.split(key, 5)
    x = jax.random.normal(kx, (B, C, H, W), dtype=jnp.float32)
    gamma = 1.0 + 0.1 * jax.random.normal(kg, (C,), dtype=jnp.float32)
    beta = 0.1 * jax.random.normal(kb, (C,), dtype=jnp.float32)
    running_mean = 0.1 * jax.random.normal(km, (C,), dtype=jnp.float32)
    running_var = jax.random.uniform(kv, (C,), dtype=jnp.float32, minval=0.5, maxval=1.5)

    out = bn_blur_block(x, gamma, beta, running_mean, running_var)
    out = jax.block_until_ready(out)

    ref = _reference(x, gamma, beta, running_mean, running_var)
    assert out.shape == (B, C, H // 2, W // 2), out.shape
    assert jnp.allclose(out, ref, atol=1e-4, rtol=1e-4), float(jnp.max(jnp.abs(out - ref)))

    print("KERNEL_OK")
</pallas_src>

<mosaic_0001>
module attributes {stable_mosaic.version = 11 : i64} {
  func.func @_bn_relu_pool_kernel(%arg0: i32, %arg1: memref<4x16x32xf32, #tpu.memory_space<vmem>>, %arg2: memref<1x32xf32, #tpu.memory_space<vmem>>, %arg3: memref<1x32xf32, #tpu.memory_space<vmem>>, %arg4: memref<16x32xf32, #tpu.memory_space<vmem>>) attributes {dimension_semantics = [#tpu.dimension_semantics<parallel>], iteration_bounds = array<i64: 1>, scalar_prefetch = 0 : i64, scratch_operands = 0 : i64, tpu.core_type = #tpu.core_type<tc>, window_params = [{transform_indices = @transform_0, window_bounds = array<i64: 4, 16, 32>}, {pipeline_mode = #tpu.pipeline_mode<synchronous>, transform_indices = @transform_1, window_bounds = array<i64: 1, 32>}, {pipeline_mode = #tpu.pipeline_mode<synchronous>, transform_indices = @transform_2, window_bounds = array<i64: 1, 32>}, {transform_indices = @transform_3, window_bounds = array<i64: 16, 32>}]} {
    %c0 = arith.constant 0 : index
    %c0_0 = arith.constant 0 : index
    %0 = vector.load %arg2[%c0, %c0_0] : memref<1x32xf32, #tpu.memory_space<vmem>>, vector<1x32xf32>
    %c0_1 = arith.constant 0 : index
    %c0_2 = arith.constant 0 : index
    %1 = vector.load %arg3[%c0_1, %c0_2] : memref<1x32xf32, #tpu.memory_space<vmem>>, vector<1x32xf32>
    %c0_3 = arith.constant 0 : index
    %c0_4 = arith.constant 0 : index
    %c0_5 = arith.constant 0 : index
    %2 = vector.load %arg1[%c0_3, %c0_4, %c0_5] : memref<4x16x32xf32, #tpu.memory_space<vmem>>, vector<1x16x32xf32>
    %3 = vector.shape_cast %2 : vector<1x16x32xf32> to vector<16x32xf32>
    %4 = vector.broadcast %0 : vector<1x32xf32> to vector<16x32xf32>
    %5 = arith.mulf %3, %4 : vector<16x32xf32>
    %6 = vector.broadcast %1 : vector<1x32xf32> to vector<16x32xf32>
    %7 = arith.addf %5, %6 : vector<16x32xf32>
    %cst = arith.constant 0.000000e+00 : f32
    %8 = vector.broadcast %cst : f32 to vector<16x32xf32>
    %9 = arith.maximumf %7, %8 : vector<16x32xf32>
    %c1 = arith.constant 1 : index
    %c0_6 = arith.constant 0 : index
    %c0_7 = arith.constant 0 : index
    %10 = vector.load %arg1[%c1, %c0_6, %c0_7] : memref<4x16x32xf32, #tpu.memory_space<vmem>>, vector<1x16x32xf32>
    %11 = vector.shape_cast %10 : vector<1x16x32xf32> to vector<16x32xf32>
    %12 = vector.broadcast %0 : vector<1x32xf32> to vector<16x32xf32>
    %13 = arith.mulf %11, %12 : vector<16x32xf32>
    %14 = vector.broadcast %1 : vector<1x32xf32> to vector<16x32xf32>
    %15 = arith.addf %13, %14 : vector<16x32xf32>
    %cst_8 = arith.constant 0.000000e+00 : f32
    %16 = vector.broadcast %cst_8 : f32 to vector<16x32xf32>
    %17 = arith.maximumf %15, %16 : vector<16x32xf32>
    %18 = arith.addf %9, %17 : vector<16x32xf32>
    %c2 = arith.constant 2 : index
    %c0_9 = arith.constant 0 : index
    %c0_10 = arith.constant 0 : index
    %19 = vector.load %arg1[%c2, %c0_9, %c0_10] : memref<4x16x32xf32, #tpu.memory_space<vmem>>, vector<1x16x32xf32>
    %20 = vector.shape_cast %19 : vector<1x16x32xf32> to vector<16x32xf32>
    %21 = vector.broadcast %0 : vector<1x32xf32> to vector<16x32xf32>
    %22 = arith.mulf %20, %21 : vector<16x32xf32>
    %23 = vector.broadcast %1 : vector<1x32xf32> to vector<16x32xf32>
    %24 = arith.addf %22, %23 : vector<16x32xf32>
    %cst_11 = arith.constant 0.000000e+00 : f32
    %25 = vector.broadcast %cst_11 : f32 to vector<16x32xf32>
    %26 = arith.maximumf %24, %25 : vector<16x32xf32>
    %27 = arith.addf %18, %26 : vector<16x32xf32>
    %c3 = arith.constant 3 : index
    %c0_12 = arith.constant 0 : index
    %c0_13 = arith.constant 0 : index
    %28 = vector.load %arg1[%c3, %c0_12, %c0_13] : memref<4x16x32xf32, #tpu.memory_space<vmem>>, vector<1x16x32xf32>
    %29 = vector.shape_cast %28 : vector<1x16x32xf32> to vector<16x32xf32>
    %30 = vector.broadcast %0 : vector<1x32xf32> to vector<16x32xf32>
    %31 = arith.mulf %29, %30 : vector<16x32xf32>
    %32 = vector.broadcast %1 : vector<1x32xf32> to vector<16x32xf32>
    %33 = arith.addf %31, %32 : vector<16x32xf32>
    %cst_14 = arith.constant 0.000000e+00 : f32
    %34 = vector.broadcast %cst_14 : f32 to vector<16x32xf32>
    %35 = arith.maximumf %33, %34 : vector<16x32xf32>
    %36 = arith.addf %27, %35 : vector<16x32xf32>
    %cst_15 = arith.constant 2.500000e-01 : f32
    %37 = vector.broadcast %cst_15 : f32 to vector<16x32xf32>
    %38 = arith.mulf %36, %37 : vector<16x32xf32>
    %c0_16 = arith.constant 0 : index
    %c0_17 = arith.constant 0 : index
    %39 = vector.load %arg4[%c0_16, %c0_17] : memref<16x32xf32, #tpu.memory_space<vmem>>, vector<16x32xf32>
    tpu.vector_store %arg4[%c0_16, %c0_17], %38 {strides = array<i32>} : memref<16x32xf32, #tpu.memory_space<vmem>>, vector<16x32xf32>,
    return
  }
  func.func @transform_0(%arg0: i32) -> (i32, i32, i32) {
    %c0_i32 = arith.constant 0 : i32
    %c0_i32_0 = arith.constant 0 : i32
    %c0_i32_1 = arith.constant 0 : i32
    return %c0_i32, %arg0, %c0_i32_0 : i32, i32, i32
  }
  func.func @transform_1(%arg0: i32) -> (i32, i32) {
    %c0_i32 = arith.constant 0 : i32
    %c0_i32_0 = arith.constant 0 : i32
    %c0_i32_1 = arith.constant 0 : i32
    return %c0_i32, %c0_i32_0 : i32, i32
  }
  func.func @transform_2(%arg0: i32) -> (i32, i32) {
    %c0_i32 = arith.constant 0 : i32
    %c0_i32_0 = arith.constant 0 : i32
    %c0_i32_1 = arith.constant 0 : i32
    return %c0_i32, %c0_i32_0 : i32, i32
  }
  func.func @transform_3(%arg0: i32) -> (i32, i32) {
    %c0_i32 = arith.constant 0 : i32
    %c0_i32_0 = arith.constant 0 : i32
    return %arg0, %c0_i32 : i32, i32
  }
}

</mosaic_0001>

<llo_original>
// kernel: tpu_custom_call.1
$region0: #{tpu_custom_call.1}
  #allocation0 [shape = 'u32[]', space=smem, size = 0x4, offset = 0x4, fixed_abs, tag = 'smem constant byte address 0x4 - core index']
  #allocation1 [shape = 'u32[144,128]{1,0:T(1,128)}', space=vmem, size = 0x12000, scoped, tag = 'internal scratch']
  %s0 = inlined_call_operand.hbm [shape: f32[4,16,32], index: 0, kind: input, shape index: {}]
  %s1 = inlined_call_operand.vmem [shape: f32[1,32], index: 1, kind: input, shape index: {}]
  %s2 = inlined_call_operand.vmem [shape: f32[1,32], index: 2, kind: input, shape index: {}]
  %s3 = inlined_call_operand.hbm [shape: f32[16,32], index: 3, kind: output, shape index: {}]
  %s4 = sld [smem:[#allocation0]]
  $region26: #{tpu_custom_call.1} parent=0
    _
  %s6 = ssub.s32 1, %s4
  %s7 = scalar_select 0, %s6, %s4
  $region1: #{tpu_custom_call.1} parent=0
    #allocation2 [shape = 'u8[32768]{0}', space=vmem, size = 0x8000, scoped, tag = 'input window, operand 0, single buffered']
    #allocation3 [shape = 's32[1]{0}', space=sflag, size = 0x4, scoped, tag = 'scoped memory for tpu_custom_call.1']
    #allocation4 [shape = 's32[1]{0}', space=sflag, size = 0x4, scoped, tag = 'scoped memory for tpu_custom_call.1']
    #allocation5 [shape = 'u8[8192]{0}', space=vmem, size = 0x2000, scoped, tag = 'output window, operand 0, single buffered']
    %8 = vsyncpa [#allocation3], 0
    %9 = vsyncpa [#allocation4], 0
    // Predicated region
    $region2: #{tpu_custom_call.1} parent=1 // pred_check
      _
    $region3: #{tpu_custom_call.1} parent=1 // pred_check_branch
      %11 = sbr.rel (0) target = $region5
    $region4: #{tpu_custom_call.1} parent=1 // pred_region
      %s13 = ssub.s32 1024, 1024
      %14 = vsyncadd [#allocation3], %s13
      %s15 = sshll.u32 [#allocation2], 4
      %s16 = int_to_ptr.vmem [resolvable:$true] %s15
      %21 = dma.hbm_to_vmem [thread:$0]  %s0, 1024, %s16, [#allocation3], 128, 128, 8
    $region5: #{tpu_custom_call.1} parent=1 // pred_fallthru
      _
    // Predicated region
    $region6: #{tpu_custom_call.1} parent=1 // pred_check
      _
    $region7: #{tpu_custom_call.1} parent=1 // pred_check_branch
      %23 = sbr.rel (0) target = $region9
    $region8: #{tpu_custom_call.1} parent=1 // pred_region
      _
    $region9: #{tpu_custom_call.1} parent=1 // pred_fallthru
      _
    // Predicated region
    $region10: #{tpu_custom_call.1} parent=1 // pred_check
      _
    $region11: #{tpu_custom_call.1} parent=1 // pred_check_branch
      %25 = sbr.rel (0) target = $region13
    $region12: #{tpu_custom_call.1} parent=1 // pred_region
      _
    $region13: #{tpu_custom_call.1} parent=1 // pred_fallthru
      _
    // Predicated region
    $region14: #{tpu_custom_call.1} parent=1 // pred_check
      _
    $region15: #{tpu_custom_call.1} parent=1 // pred_check_branch
      %27 = sbr.rel (0) target = $region17
    $region16: #{tpu_custom_call.1} parent=1 // pred_region
      %28 = dma.done [#allocation3], 1024
    $region17: #{tpu_custom_call.1} parent=1 // pred_fallthru
      _
    %v29 = vld [vmem:[%s1] sm:$0x1]
    %v30 = vld [vmem:[%s2] sm:$0x1]
    %v31 = vld [vmem:[#allocation2] sm:$0xff]
    %v32 = vld [vmem:[#allocation2 + $0x8] sm:$0xff]
    %v34 = vlaneseq
    %v35 = vshrl.u32 %v34, 7
    %v36 = vsub.s32 0, %v35
    %v37 = vrot.slane %v29, %v36
    %v39 = vmul.f32 %v31, %v37
    %v40 = vmul.f32 %v32, %v37
    %v42 = vlaneseq
    %v43 = vshrl.u32 %v42, 7
    %v44 = vsub.s32 0, %v43
    %v45 = vrot.slane %v30, %v44
    %v47 = vadd.f32 %v39, %v45
    %v48 = vadd.f32 %v40, %v45
    %v49 = vmax.f32 %v47, 0.0
    %v50 = vmax.f32 %v48, 0.0
    %s51 = scalar_lea.vmem [#allocation2], 16
    %v52 = vld [vmem:[%s51] sm:$0xff]
    %v53 = vld [vmem:[%s51 + $0x8] sm:$0xff]
    %v54 = vmul.f32 %v52, %v37
    %v55 = vmul.f32 %v53, %v37
    %v56 = vadd.f32 %v54, %v45
    %v57 = vadd.f32 %v55, %v45
    %v58 = vmax.f32 %v56, 0.0
    %v59 = vmax.f32 %v57, 0.0
    %v60 = vadd.f32 %v49, %v58
    %v61 = vadd.f32 %v50, %v59
    %s62 = scalar_lea.vmem [#allocation2], 32
    %v63 = vld [vmem:[%s62] sm:$0xff]
    %v64 = vld [vmem:[%s62 + $0x8] sm:$0xff]
    %v65 = vmul.f32 %v63, %v37
    %v66 = vmul.f32 %v64, %v37
    %v67 = vadd.f32 %v65, %v45
    %v68 = vadd.f32 %v66, %v45
    %v69 = vmax.f32 %v67, 0.0
    %v70 = vmax.f32 %v68, 0.0
    %v71 = vadd.f32 %v60, %v69
    %v72 = vadd.f32 %v61, %v70
    %s73 = scalar_lea.vmem [#allocation2], 48
    %v74 = vld [vmem:[%s73] sm:$0xff]
    %v75 = vld [vmem:[%s73 + $0x8] sm:$0xff]
    %v76 = vmul.f32 %v74, %v37
    %v77 = vmul.f32 %v75, %v37
    %v78 = vadd.f32 %v76, %v45
    %v79 = vadd.f32 %v77, %v45
    %v80 = vmax.f32 %v78, 0.0
    %v81 = vmax.f32 %v79, 0.0
    %v82 = vadd.f32 %v71, %v80
    %v83 = vadd.f32 %v72, %v81
    %v84 = vmul.f32 %v82, 0.25
    %v85 = vmul.f32 %v83, 0.25
    %vm86 = vcmask 261120
    %87 = vst.msk [vmem:[#allocation5] sm:$0xff] %vm86, %v84
    %88 = vst.msk [vmem:[#allocation5 + $0x8] sm:$0xff] %vm86, %v85
    // Predicated region
    $region18: #{tpu_custom_call.1} parent=1 // pred_check
      _
    $region19: #{tpu_custom_call.1} parent=1 // pred_check_branch
      %90 = sbr.rel (0) target = $region21
    $region20: #{tpu_custom_call.1} parent=1 // pred_region
      %s92 = ssub.s32 256, 256
      %93 = vsyncadd [#allocation4], %s92
      %s94 = sshll.u32 [#allocation5], 4
      %s95 = int_to_ptr.vmem [resolvable:$true] %s94
      %100 = dma.vmem_to_hbm [thread:$0]  %s95, 256, %s3, [#allocation4], 128, 128, 8
    $region21: #{tpu_custom_call.1} parent=1 // pred_fallthru
      _
    // Predicated region
    $region22: #{tpu_custom_call.1} parent=1 // pred_check
      _
    $region23: #{tpu_custom_call.1} parent=1 // pred_check_branch
      %102 = sbr.rel (0) target = $region25
    $region24: #{tpu_custom_call.1} parent=1 // pred_region
      %103 = dma.done [#allocation4], 256
    $region25: #{tpu_custom_call.1} parent=1 // pred_fallthru
      _
    %104 = vsyncpa [#allocation3], 1
    %105 = vsyncpa [#allocation4], 1

</llo_original>
